<compile_context>
chip_gen: v7x
topology: tpu7x:2x2x1
jax: 0.10.0
libtpu: 0.0.40
codegen_flags: <defaults>
</compile_context>

<pallas_src>
import functools
import numpy as np

import jax
import jax.numpy as jnp
from jax.experimental import pallas as pl
from jax.experimental.pallas import tpu as pltpu


def _round_up(x, m):
    return ((x + m - 1) // m) * m


def _pick_tm(M, max_tm=512):
    """M-tile size.

    M <= max_tm: one full-extent tile (always a legal block shape, no
    padding, no partial blocks).  Otherwise a 256-aligned tile (full MXU row
    occupancy on v6e/v7x) capped at 512 so the double-buffered VMEM
    footprint stays well inside v7x's 64 MiB / 32 MiB-scoped budget while
    giving the parallel M axis multiple tiles for both TensorCores.
    """
    if M <= max_tm:
        return M
    return max_tm


def _matmul_bias_kernel(p_ref, w_ref, b_ref, o_ref):
    # (tm, K) bf16 @ (K, N) bf16 on the MXU with f32 accumulation;
    # f32 bias epilogue on the VPU.
    acc = jnp.dot(p_ref[...], w_ref[...], preferred_element_type=jnp.float32)
    o_ref[...] = (acc + b_ref[...]).astype(o_ref.dtype)


def patch_embed_matmul(patches, weight_2d, bias, *, max_tm=512,
                       out_dtype=jnp.float32):
    """patches: (M, K) bf16, weight_2d: (K, N) bf16, bias: (N,) -> (M, N)."""
    M, K = patches.shape
    K2, N = weight_2d.shape
    assert K == K2, (K, K2)

    # Only K gets an explicit zero-pad: OOB along the contraction would
    # corrupt valid outputs, whereas ragged M tiles only feed masked stores.
    # 256-multiple keeps full contraction passes on v6e/v7x's 256-wide MXU;
    # it is a no-op for the common K = 256 / 768 / ... cases.
    k_pad = _round_up(K, 256)
    if k_pad != K:
        patches = jnp.pad(patches, ((0, 0), (0, k_pad - K)))
        weight_2d = jnp.pad(weight_2d, ((0, k_pad - K), (0, 0)))

    tm = _pick_tm(M, max_tm)
    grid = (pl.cdiv(M, tm),)

    b2d = bias.astype(jnp.float32).reshape(1, N)

    out_bytes = jnp.dtype(out_dtype).itemsize
    cost = pl.CostEstimate(
        flops=2 * M * k_pad * N,
        transcendentals=0,
        bytes_accessed=(M * k_pad * 2 + k_pad * N * 2 + N * 4
                        + M * N * out_bytes),
    )

    return pl.pallas_call(
        _matmul_bias_kernel,
        out_shape=jax.ShapeDtypeStruct((M, N), out_dtype),
        grid_spec=pltpu.PrefetchScalarGridSpec(
            num_scalar_prefetch=0,
            grid=grid,
            in_specs=[
                # Activation tile marches over M; weight and bias block
                # indices are constant across the (1-D) grid -> DMA'd once,
                # then VMEM-resident for every step.
                pl.BlockSpec((tm, k_pad), lambda i: (i, 0)),
                pl.BlockSpec((k_pad, N), lambda i: (0, 0)),
                pl.BlockSpec((1, N), lambda i: (0, 0)),
            ],
            out_specs=pl.BlockSpec((tm, N), lambda i: (i, 0)),
        ),
        compiler_params=pltpu.CompilerParams(
            dimension_semantics=("parallel",)),
        cost_estimate=cost,
    )(patches, weight_2d, b2d)


def _extract_patches(x, patch_size, stride):
    """im2col with channel-major (C, kh, kw) flattening (PyTorch order)."""
    B, C, H, W = x.shape
    kh, kw = patch_size
    sh, sw = stride
    h_out = (H - kh) // sh + 1
    w_out = (W - kw) // sw + 1
    P = h_out * w_out
    K = C * kh * kw

    if (kh, kw) == (sh, sw):
        # Non-overlapping (standard ViT case): pure reshape/transpose,
        # no data duplication.
        xc = x[:, :, :h_out * kh, :w_out * kw]
        p = xc.reshape(B, C, h_out, kh, w_out, kw)
        p = p.transpose(0, 2, 4, 1, 3, 5)          # (B, h_out, w_out, C, kh, kw)
        patches = p.reshape(B, P, K)
    else:
        # Overlapping windows: single fused patch-extraction op whose output
        # channels are ordered (c, kh, kw) channel-major, matching
        # weight.reshape(D, C*kh*kw).
        cols = jax.lax.conv_general_dilated_patches(
            x, filter_shape=(kh, kw), window_strides=(sh, sw),
            padding="VALID",
            dimension_numbers=("NCHW", "OIHW", "NCHW"))   # (B, K, h_out, w_out)
        patches = cols.reshape(B, K, P).transpose(0, 2, 1)
    return patches, P, K


def patch_embed_new_forward(x, weight, bias, patch_size, stride,
                            out_dtype=jnp.float32):
    """Forward pass of PatchEmbed_new.

    x:      (B, C, H, W)            -- NCHW, like PyTorch
    weight: (embed_dim, C, kh, kw)  -- Conv2d weight
    bias:   (embed_dim,)
    returns (B, num_patches, embed_dim), out_dtype (f32 by default)
    """
    B = x.shape[0]
    D = weight.shape[0]

    # Cast to bf16 *before* extraction: halves the im2col HBM traffic; the
    # kernel still accumulates in f32.
    xb = x.astype(jnp.bfloat16)
    patches, P, K = _extract_patches(xb, patch_size, stride)   # (B, P, K) bf16
    w2d = weight.reshape(D, K).T.astype(jnp.bfloat16)          # (K, D) bf16
    out = patch_embed_matmul(patches.reshape(B * P, K), w2d, bias,
                             out_dtype=out_dtype)              # (B*P, D)
    return out.reshape(B, P, D)


if __name__ == "__main__":
    # Small, consistent configuration:
    #   img_size=16, patch_size=8, in_chans=4, embed_dim=32, stride=4
    #   -> h_out = w_out = 3, num_patches = 9
    B, C, H, W = 2, 4, 16, 16
    embed_dim = 32
    patch_size = (8, 8)
    stride = (4, 4)

    key = jax.random.PRNGKey(0)
    kx, kw_, kb = jax.random.split(key, 3)
    x = jax.random.normal(kx, (B, C, H, W), dtype=jnp.float32)
    # Deterministic synthetic parameters (Conv2d-shaped).
    fan_in = C * patch_size[0] * patch_size[1]
    bound = 1.0 / np.sqrt(fan_in)
    weight = jax.random.uniform(kw_, (embed_dim, C, patch_size[0], patch_size[1]),
                                minval=-bound, maxval=bound, dtype=jnp.float32)
    bias = jax.random.uniform(kb, (embed_dim,), minval=-bound, maxval=bound,
                              dtype=jnp.float32)

    fwd = jax.jit(functools.partial(patch_embed_new_forward,
                                    patch_size=patch_size, stride=stride))
    out = jax.block_until_ready(fwd(x, weight, bias))

    # Reference: strided conv (NCHW) + flatten(2).transpose(1,2), all f32.
    ref = jax.lax.conv_general_dilated(
        x, weight, window_strides=stride, padding="VALID",
        dimension_numbers=("NCHW", "OIHW", "NCHW"))
    ref = ref + bias[None, :, None, None]
    ref = ref.reshape(B, embed_dim, -1).transpose(0, 2, 1)

    assert out.shape == (B, 9, embed_dim), out.shape
    # bf16 operands (f32 accumulate) -> loosened tolerance vs f32 reference.
    np.testing.assert_allclose(np.asarray(out), np.asarray(ref),
                               rtol=2e-2, atol=2e-2)
    print("KERNEL_OK")
</pallas_src>

<mosaic_0001>
module attributes {stable_mosaic.version = 11 : i64} {
  func.func @_matmul_bias_kernel(%arg0: i32, %arg1: memref<18x256xbf16, #tpu.memory_space<vmem>>, %arg2: memref<256x32xbf16, #tpu.memory_space<vmem>>, %arg3: memref<1x32xf32, #tpu.memory_space<vmem>>, %arg4: memref<18x32xf32, #tpu.memory_space<vmem>>) attributes {dimension_semantics = [#tpu.dimension_semantics<parallel>], iteration_bounds = array<i64: 1>, scalar_prefetch = 0 : i64, scratch_operands = 0 : i64, tpu.core_type = #tpu.core_type<tc>, window_params = [{transform_indices = @transform_0, window_bounds = array<i64: 18, 256>}, {pipeline_mode = #tpu.pipeline_mode<synchronous>, transform_indices = @transform_1, window_bounds = array<i64: 256, 32>}, {pipeline_mode = #tpu.pipeline_mode<synchronous>, transform_indices = @transform_2, window_bounds = array<i64: 1, 32>}, {transform_indices = @transform_3, window_bounds = array<i64: 18, 32>}]} {
    %c0 = arith.constant 0 : index
    %c0_0 = arith.constant 0 : index
    %0 = vector.load %arg1[%c0, %c0_0] : memref<18x256xbf16, #tpu.memory_space<vmem>>, vector<18x256xbf16>
    %c0_1 = arith.constant 0 : index
    %c0_2 = arith.constant 0 : index
    %1 = vector.load %arg2[%c0_1, %c0_2] : memref<256x32xbf16, #tpu.memory_space<vmem>>, vector<256x32xbf16>
    %cst = arith.constant dense<0.000000e+00> : vector<18x32xf32>
    %2 = tpu.matmul %0, %1, %cst {dimension_numbers = #tpu.dot_dimension_numbers<[1], [0], [0], [1], [0, 0, 1, 1], [], []>} : vector<18x256xbf16>, vector<256x32xbf16>, vector<18x32xf32> -> vector<18x32xf32>
    %c0_3 = arith.constant 0 : index
    %c0_4 = arith.constant 0 : index
    %3 = vector.load %arg3[%c0_3, %c0_4] : memref<1x32xf32, #tpu.memory_space<vmem>>, vector<1x32xf32>
    %4 = vector.broadcast %3 : vector<1x32xf32> to vector<18x32xf32>
    %5 = arith.addf %2, %4 : vector<18x32xf32>
    %c0_5 = arith.constant 0 : index
    %c0_6 = arith.constant 0 : index
    %6 = vector.load %arg4[%c0_5, %c0_6] : memref<18x32xf32, #tpu.memory_space<vmem>>, vector<18x32xf32>
    tpu.vector_store %arg4[%c0_5, %c0_6], %5 {strides = array<i32>} : memref<18x32xf32, #tpu.memory_space<vmem>>, vector<18x32xf32>,
    return
  }
  func.func @transform_0(%arg0: i32) -> (i32, i32) {
    %c0_i32 = arith.constant 0 : i32
    %c0_i32_0 = arith.constant 0 : i32
    return %arg0, %c0_i32 : i32, i32
  }
  func.func @transform_1(%arg0: i32) -> (i32, i32) {
    %c0_i32 = arith.constant 0 : i32
    %c0_i32_0 = arith.constant 0 : i32
    %c0_i32_1 = arith.constant 0 : i32
    return %c0_i32, %c0_i32_0 : i32, i32
  }
  func.func @transform_2(%arg0: i32) -> (i32, i32) {
    %c0_i32 = arith.constant 0 : i32
    %c0_i32_0 = arith.constant 0 : i32
    %c0_i32_1 = arith.constant 0 : i32
    return %c0_i32, %c0_i32_0 : i32, i32
  }
  func.func @transform_3(%arg0: i32) -> (i32, i32) {
    %c0_i32 = arith.constant 0 : i32
    %c0_i32_0 = arith.constant 0 : i32
    return %arg0, %c0_i32 : i32, i32
  }
}

</mosaic_0001>

<llo_original>
// kernel: patch_embed_new_forward.1
$region0: #{patch_embed_new_forward.1}
  #allocation0 [shape = 'u32[]', space=smem, size = 0x4, offset = 0x4, fixed_abs, tag = 'smem constant byte address 0x4 - core index']
  #allocation1 [shape = 'u32[144,128]{1,0:T(1,128)}', space=vmem, size = 0x12000, scoped, tag = 'internal scratch']
  %s0 = inlined_call_operand.vmem [shape: bf16[18,256], index: 0, kind: input, shape index: {}]
  %s1 = inlined_call_operand.vmem [shape: bf16[256,32], index: 1, kind: input, shape index: {}]
  %s2 = inlined_call_operand.vmem [shape: f32[1,32], index: 2, kind: input, shape index: {}]
  %s3 = inlined_call_operand.vmem [shape: f32[18,32], index: 3, kind: output, shape index: {}]
  %s4 = sld [smem:[#allocation0]]
  $region22: #{patch_embed_new_forward.1} parent=0
    _
  %s6 = ssub.s32 1, %s4
  %s7 = scalar_select 0, %s6, %s4
  // Predicated region
  $region2: #{patch_embed_new_forward.1} parent=0 // pred_check
    _
  $region3: #{patch_embed_new_forward.1} parent=0 // pred_check_branch
    %9 = sbr.rel (0) target = $region5
  $region4: #{patch_embed_new_forward.1} parent=0 // pred_region
    _
  $region5: #{patch_embed_new_forward.1} parent=0 // pred_fallthru
    _
  // Predicated region
  $region6: #{patch_embed_new_forward.1} parent=0 // pred_check
    _
  $region7: #{patch_embed_new_forward.1} parent=0 // pred_check_branch
    %11 = sbr.rel (0) target = $region9
  $region8: #{patch_embed_new_forward.1} parent=0 // pred_region
    _
  $region9: #{patch_embed_new_forward.1} parent=0 // pred_fallthru
    _
  // Predicated region
  $region10: #{patch_embed_new_forward.1} parent=0 // pred_check
    _
  $region11: #{patch_embed_new_forward.1} parent=0 // pred_check_branch
    %13 = sbr.rel (0) target = $region13
  $region12: #{patch_embed_new_forward.1} parent=0 // pred_region
    _
  $region13: #{patch_embed_new_forward.1} parent=0 // pred_fallthru
    _
  %v15 = vld [vmem:[%s0] sm:$0xff]
  %v16 = vld [vmem:[%s0 + $0x8] sm:$0xff]
  %v17 = vld [vmem:[%s0 + $0x10] sm:$0x11]
  %v18 = vld [vmem:[%s1] sm:$0xf]
  %v19 = vld [vmem:[%s1 + $0x4] sm:$0xf]
  %v20 = vld [vmem:[%s1 + $0x8] sm:$0xf]
  %v21 = vld [vmem:[%s1 + $0xc] sm:$0xf]
  %v22 = vld [vmem:[%s1 + $0x10] sm:$0xf]
  %v23 = vld [vmem:[%s1 + $0x14] sm:$0xf]
  %v24 = vld [vmem:[%s1 + $0x18] sm:$0xf]
  %v25 = vld [vmem:[%s1 + $0x1c] sm:$0xf]
  %v26 = vld [vmem:[%s1 + $0x20] sm:$0xf]
  %v27 = vld [vmem:[%s1 + $0x24] sm:$0xf]
  %v28 = vld [vmem:[%s1 + $0x28] sm:$0xf]
  %v29 = vld [vmem:[%s1 + $0x2c] sm:$0xf]
  %v30 = vld [vmem:[%s1 + $0x30] sm:$0xf]
  %v31 = vld [vmem:[%s1 + $0x34] sm:$0xf]
  %v32 = vld [vmem:[%s1 + $0x38] sm:$0xf]
  %v33 = vld [vmem:[%s1 + $0x3c] sm:$0xf]
  %v34 = vld [vmem:[%s1 + $0x40] sm:$0xf]
  %v35 = vld [vmem:[%s1 + $0x44] sm:$0xf]
  %v36 = vld [vmem:[%s1 + $0x48] sm:$0xf]
  %v37 = vld [vmem:[%s1 + $0x4c] sm:$0xf]
  %v38 = vld [vmem:[%s1 + $0x50] sm:$0xf]
  %v39 = vld [vmem:[%s1 + $0x54] sm:$0xf]
  %v40 = vld [vmem:[%s1 + $0x58] sm:$0xf]
  %v41 = vld [vmem:[%s1 + $0x5c] sm:$0xf]
  %v42 = vld [vmem:[%s1 + $0x60] sm:$0xf]
  %v43 = vld [vmem:[%s1 + $0x64] sm:$0xf]
  %v44 = vld [vmem:[%s1 + $0x68] sm:$0xf]
  %v45 = vld [vmem:[%s1 + $0x6c] sm:$0xf]
  %v46 = vld [vmem:[%s1 + $0x70] sm:$0xf]
  %v47 = vld [vmem:[%s1 + $0x74] sm:$0xf]
  %v48 = vld [vmem:[%s1 + $0x78] sm:$0xf]
  %v49 = vld [vmem:[%s1 + $0x7c] sm:$0xf]
  %v50 = vld [vmem:[%s2] sm:$0x1]
  %v52 = vlaneseq
  %v53 = vshrl.u32 %v52, 7
  %v54 = vsub.s32 0, %v53
  %v55 = vrot.slane %v50, %v54
  %v60 = vunpack.c.l.b16 %v15
  %v61 = vunpack.c.h.b16 %v15
  %v62 = vunpack.c.l.b16 %v16
  %v63 = vunpack.c.h.b16 %v16
  %v64 = vunpack.c.l.b16 %v17
  %v65 = vunpack.c.h.b16 %v17
  %v66 = vpack.c.b16 %v62, %v60
  %v67 = vpack.c.b16 %v63, %v61
  %v68 = vpack.c.b16 %v64, %v64
  %v69 = vpack.c.b16 %v65, %v65
  %v106 = vunpack.c.l.b16 %v18
  %v107 = vunpack.c.l.b16 %v19
  %v108 = vunpack.c.l.b16 %v20
  %v109 = vunpack.c.l.b16 %v21
  %v110 = vunpack.c.l.b16 %v22
  %v111 = vunpack.c.l.b16 %v23
  %v112 = vunpack.c.l.b16 %v24
  %v113 = vunpack.c.l.b16 %v25
  %v114 = vunpack.c.l.b16 %v26
  %v115 = vunpack.c.l.b16 %v27
  %v116 = vunpack.c.l.b16 %v28
  %v117 = vunpack.c.l.b16 %v29
  %v118 = vunpack.c.l.b16 %v30
  %v119 = vunpack.c.l.b16 %v31
  %v120 = vunpack.c.l.b16 %v32
  %v121 = vunpack.c.l.b16 %v33
  %v122 = vunpack.c.l.b16 %v34
  %v123 = vunpack.c.l.b16 %v35
  %v124 = vunpack.c.l.b16 %v36
  %v125 = vunpack.c.l.b16 %v37
  %v126 = vunpack.c.l.b16 %v38
  %v127 = vunpack.c.l.b16 %v39
  %v128 = vunpack.c.l.b16 %v40
  %v129 = vunpack.c.l.b16 %v41
  %v130 = vunpack.c.l.b16 %v42
  %v131 = vunpack.c.l.b16 %v43
  %v132 = vunpack.c.l.b16 %v44
  %v133 = vunpack.c.l.b16 %v45
  %v134 = vunpack.c.l.b16 %v46
  %v135 = vunpack.c.l.b16 %v47
  %v136 = vunpack.c.l.b16 %v48
  %v137 = vunpack.c.l.b16 %v49
  %v138 = vpack.c.b16 %v107, %v106
  %v139 = vpack.c.b16 %v109, %v108
  %v140 = vpack.c.b16 %v111, %v110
  %v141 = vpack.c.b16 %v113, %v112
  %v142 = vpack.c.b16 %v115, %v114
  %v143 = vpack.c.b16 %v117, %v116
  %v144 = vpack.c.b16 %v119, %v118
  %v145 = vpack.c.b16 %v121, %v120
  %v146 = vpack.c.b16 %v123, %v122
  %v147 = vpack.c.b16 %v125, %v124
  %v148 = vpack.c.b16 %v127, %v126
  %v149 = vpack.c.b16 %v129, %v128
  %v150 = vpack.c.b16 %v131, %v130
  %v151 = vpack.c.b16 %v133, %v132
  %v152 = vpack.c.b16 %v135, %v134
  %v153 = vpack.c.b16 %v137, %v136
  %170 = vmatprep.subr.bf16.mxu0 0
  %171 = vmatpush1.bf16.msra.mxu0 %v138
  %172 = vmatprep.subr.bf16.mxu0 0
  %173 = vmatpush1.bf16.msra.mxu0 %v139
  %174 = vmatprep.subr.bf16.mxu0 0
  %175 = vmatpush1.bf16.msra.mxu0 %v140
  %176 = vmatprep.subr.bf16.mxu0 0
  %177 = vmatpush1.bf16.msra.mxu0 %v141
  %178 = vmatprep.subr.bf16.mxu0 0
  %179 = vmatpush1.bf16.msra.mxu0 %v142
  %180 = vmatprep.subr.bf16.mxu0 0
  %181 = vmatpush1.bf16.msra.mxu0 %v143
  %182 = vmatprep.subr.bf16.mxu0 0
  %183 = vmatpush1.bf16.msra.mxu0 %v144
  %184 = vmatprep.subr.bf16.mxu0 0
  %185 = vmatpush1.bf16.msra.mxu0 %v145
  %186 = vmatprep.subr.bf16.mxu0 0
  %187 = vmatpush1.bf16.msra.mxu0 %v146
  %188 = vmatprep.subr.bf16.mxu0 0
  %189 = vmatpush1.bf16.msra.mxu0 %v147
  %190 = vmatprep.subr.bf16.mxu0 0
  %191 = vmatpush1.bf16.msra.mxu0 %v148
  %192 = vmatprep.subr.bf16.mxu0 0
  %193 = vmatpush1.bf16.msra.mxu0 %v149
  %194 = vmatprep.subr.bf16.mxu0 0
  %195 = vmatpush1.bf16.msra.mxu0 %v150
  %196 = vmatprep.subr.bf16.mxu0 0
  %197 = vmatpush1.bf16.msra.mxu0 %v151
  %198 = vmatprep.subr.bf16.mxu0 0
  %199 = vmatpush1.bf16.msra.mxu0 %v152
  %200 = vmatprep.subr.bf16.mxu0 0
  %201 = vmatpush1.bf16.msra.mxu0 %v153
  %202 = vmatprep.mubr.bf16.mxu0 %v67
  %203 = vmatmul.mubr.bf16.gmra.mrb[0].mxu0 %v66
  %v204 = vpop.f32.mrb[0].mxu0
  %v205 = vadd.f32 %v55, %v204
  %v206 = vpop.f32.mrb[0].mxu0
  %v207 = vpop.f32.mrb[0].mxu0
  %v208 = vadd.f32 %v55, %v207
  %v209 = vpop.f32.mrb[0].mxu0
  %210 = vmatprep.mubr.bf16.mxu0 %v69
  %211 = vmatmul.mubr.bf16.gmra.mrb[0].mxu0 %v68
  %v212 = vpop.f32.mrb[0].mxu0
  %v213 = vadd.f32 %v55, %v212
  %v214 = vpop.f32.mrb[0].mxu0
  %v215 = vpop.f32.mrb[0].mxu0
  %v216 = vpop.f32.mrb[0].mxu0
  %217 = vdwg.mxu0
  %vm218 = vcmask 261120
  %219 = vst.msk [vmem:[%s3] sm:$0xff] %vm218, %v205
  %220 = vst.msk [vmem:[%s3 + $0x8] sm:$0xff] %vm218, %v208
  %vm221 = vcmask 254976
  %222 = vst.msk [vmem:[%s3 + $0x10] sm:$0x3] %vm221, %v213
  // Predicated region
  $region14: #{patch_embed_new_forward.1} parent=0 // pred_check
    _
  $region15: #{patch_embed_new_forward.1} parent=0 // pred_check_branch
    %224 = sbr.rel (0) target = $region17
  $region16: #{patch_embed_new_forward.1} parent=0 // pred_region
    _
  $region17: #{patch_embed_new_forward.1} parent=0 // pred_fallthru
    _
  // Predicated region
  $region18: #{patch_embed_new_forward.1} parent=0 // pred_check
    _
  $region19: #{patch_embed_new_forward.1} parent=0 // pred_check_branch
    %226 = sbr.rel (0) target = $region21
  $region20: #{patch_embed_new_forward.1} parent=0 // pred_region
    _
  $region21: #{patch_embed_new_forward.1} parent=0 // pred_fallthru
    _

</llo_original>
